<compile_context>
chip_gen: v5e
topology: v5e:2x2
jax: 0.10.0
libtpu: 0.0.40
codegen_flags: <defaults>
</compile_context>

<pallas_src>
import jax
import jax.numpy as jnp
from jax.experimental import pallas as pl
from jax.experimental.pallas import tpu as pltpu

# ----- module constants (EncoderNetwork.*) -----------------------------------
ENC_INPUT_SIZE = 8    # EncoderNetwork.INPUT_SIZE
ENC_OUTPUT_SIZE = 4   # EncoderNetwork.OUTPUT_SIZE

# Layer sizes (fan_in, fan_out) for encoder (assumed mirror) + decoder (given):
LAYER_SIZES = [
    (ENC_INPUT_SIZE, 10),
    (10, 25),
    (25, ENC_OUTPUT_SIZE),
    (ENC_OUTPUT_SIZE, 25),
    (25, 10),
    (10, ENC_INPUT_SIZE),
]


# ----- Pallas kernel ----------------------------------------------------------
def autoencoder_kernel(x_ref,
                       w1, b1, w2, b2, w3, b3,
                       w4, b4, w5, b5, w6, b6,
                       o_ref):
    """Encoder+decoder MLP on one batch tile.

    x_ref : (IN,  TILE_B)   activations, batch on the lane axis
    w*    : (out, in)       PyTorch-layout weights (VMEM-resident across grid)
    b*    : (out, 1)
    o_ref : (IN,  TILE_B)
    """
    h = x_ref[...].astype(jnp.float32)
    for w_ref, b_ref in ((w1, b1), (w2, b2), (w3, b3),
                         (w4, b4), (w5, b5), (w6, b6)):
        h = jnp.dot(w_ref[...], h, preferred_element_type=jnp.float32)
        h = h + b_ref[...]              # (out, TILE_B) + (out, 1) broadcast
        h = jnp.maximum(h, 0.0)         # ReLU on the VPU (f32, v5e-safe)
    o_ref[...] = h.astype(o_ref.dtype)


def _const_spec(arr):
    """Whole-array block with a constant index_map (ndim bound, no late-binding)."""
    nd = arr.ndim
    return pl.BlockSpec(arr.shape, lambda i, _nd=nd: (0,) * _nd)


def _choose_tile_b(b_pad):
    for t in (1024, 512, 256, 128):
        if b_pad % t == 0:
            return t
    return b_pad


def autoencoder_forward(x, params):
    """x: (B, ENC_INPUT_SIZE) float32; params: list of (W (out,in), b (out,)) per layer."""
    B, f_in = x.shape
    assert f_in == ENC_INPUT_SIZE

    # Pad batch up to a multiple of 128 so the lane axis is dense, then tile it.
    b_pad = pl.cdiv(B, 128) * 128
    tile_b = _choose_tile_b(b_pad)
    grid = (b_pad // tile_b,)

    # (features, batch) layout: one-time transpose/pad in the wrapper.
    x_t = jnp.pad(x.T, ((0, 0), (0, b_pad - B)))          # (IN, B_pad)

    flat_params = []
    for (w, b) in params:
        flat_params.append(w)                              # (out, in)
        flat_params.append(b.reshape(-1, 1))               # (out, 1)

    in_specs = [pl.BlockSpec((ENC_INPUT_SIZE, tile_b), lambda i: (0, i))]
    in_specs += [_const_spec(a) for a in flat_params]
    out_spec = pl.BlockSpec((ENC_INPUT_SIZE, tile_b), lambda i: (0, i))

    out_t = pl.pallas_call(
        autoencoder_kernel,
        out_shape=jax.ShapeDtypeStruct((ENC_INPUT_SIZE, b_pad), jnp.float32),
        grid=grid,
        in_specs=in_specs,
        out_specs=out_spec,
        compiler_params=pltpu.CompilerParams(
            dimension_semantics=("parallel",)),
    )(x_t, *flat_params)

    return out_t[:, :B].T                                  # back to (B, IN)


# ----- deterministic parameter init (PyTorch-Linear-style uniform) ------------
def init_params(key):
    params = []
    for (fan_in, fan_out) in LAYER_SIZES:
        key, kw, kb = jax.random.split(key, 3)
        bound = 1.0 / jnp.sqrt(jnp.float32(fan_in))
        # PyTorch nn.Linear stores weight as (out, in); we keep that layout.
        w = jax.random.uniform(kw, (fan_out, fan_in), jnp.float32,
                               minval=-bound, maxval=bound)
        b = jax.random.uniform(kb, (fan_out,), jnp.float32,
                               minval=-bound, maxval=bound)
        params.append((w, b))
    return params


def reference_forward(x, params):
    """Pure-JAX reference of the same forward pass (for sanity check)."""
    h = x
    for (w, b) in params:
        h = jnp.maximum(h @ w.T + b, 0.0)
    return h


if __name__ == "__main__":
    key = jax.random.PRNGKey(0)
    key, kx, kp = jax.random.split(key, 3)

    batch = 8
    x = jax.random.normal(kx, (batch, ENC_INPUT_SIZE), jnp.float32)
    params = init_params(kp)

    out = autoencoder_forward(x, params)
    out = jax.block_until_ready(out)

    ref = reference_forward(x, params)
    assert out.shape == (batch, ENC_INPUT_SIZE)
    assert jnp.allclose(out, ref, atol=1e-5, rtol=1e-5)

    print("KERNEL_OK")
</pallas_src>

<mosaic_0001>
module attributes {stable_mosaic.version = 11 : i64} {
  func.func @autoencoder_kernel(%arg0: i32, %arg1: memref<8x128xf32, #tpu.memory_space<vmem>>, %arg2: memref<10x8xf32, #tpu.memory_space<vmem>>, %arg3: memref<10x1xf32, #tpu.memory_space<vmem>>, %arg4: memref<25x10xf32, #tpu.memory_space<vmem>>, %arg5: memref<25x1xf32, #tpu.memory_space<vmem>>, %arg6: memref<4x25xf32, #tpu.memory_space<vmem>>, %arg7: memref<4x1xf32, #tpu.memory_space<vmem>>, %arg8: memref<25x4xf32, #tpu.memory_space<vmem>>, %arg9: memref<25x1xf32, #tpu.memory_space<vmem>>, %arg10: memref<10x25xf32, #tpu.memory_space<vmem>>, %arg11: memref<10x1xf32, #tpu.memory_space<vmem>>, %arg12: memref<8x10xf32, #tpu.memory_space<vmem>>, %arg13: memref<8x1xf32, #tpu.memory_space<vmem>>, %arg14: memref<8x128xf32, #tpu.memory_space<vmem>>) attributes {dimension_semantics = [#tpu.dimension_semantics<parallel>], iteration_bounds = array<i64: 1>, scalar_prefetch = 0 : i64, scratch_operands = 0 : i64, tpu.core_type = #tpu.core_type<tc>, window_params = [{transform_indices = @transform_0, window_bounds = array<i64: 8, 128>}, {pipeline_mode = #tpu.pipeline_mode<synchronous>, transform_indices = @transform_1, window_bounds = array<i64: 10, 8>}, {pipeline_mode = #tpu.pipeline_mode<synchronous>, transform_indices = @transform_2, window_bounds = array<i64: 10, 1>}, {pipeline_mode = #tpu.pipeline_mode<synchronous>, transform_indices = @transform_3, window_bounds = array<i64: 25, 10>}, {pipeline_mode = #tpu.pipeline_mode<synchronous>, transform_indices = @transform_4, window_bounds = array<i64: 25, 1>}, {pipeline_mode = #tpu.pipeline_mode<synchronous>, transform_indices = @transform_5, window_bounds = array<i64: 4, 25>}, {pipeline_mode = #tpu.pipeline_mode<synchronous>, transform_indices = @transform_6, window_bounds = array<i64: 4, 1>}, {pipeline_mode = #tpu.pipeline_mode<synchronous>, transform_indices = @transform_7, window_bounds = array<i64: 25, 4>}, {pipeline_mode = #tpu.pipeline_mode<synchronous>, transform_indices = @transform_8, window_bounds = array<i64: 25, 1>}, {pipeline_mode = #tpu.pipeline_mode<synchronous>, transform_indices = @transform_9, window_bounds = array<i64: 10, 25>}, {pipeline_mode = #tpu.pipeline_mode<synchronous>, transform_indices = @transform_10, window_bounds = array<i64: 10, 1>}, {pipeline_mode = #tpu.pipeline_mode<synchronous>, transform_indices = @transform_11, window_bounds = array<i64: 8, 10>}, {pipeline_mode = #tpu.pipeline_mode<synchronous>, transform_indices = @transform_12, window_bounds = array<i64: 8, 1>}, {transform_indices = @transform_13, window_bounds = array<i64: 8, 128>}]} {
    %c0 = arith.constant 0 : index
    %c0_0 = arith.constant 0 : index
    %0 = vector.load %arg1[%c0, %c0_0] : memref<8x128xf32, #tpu.memory_space<vmem>>, vector<8x128xf32>
    %c0_1 = arith.constant 0 : index
    %c0_2 = arith.constant 0 : index
    %1 = vector.load %arg2[%c0_1, %c0_2] : memref<10x8xf32, #tpu.memory_space<vmem>>, vector<10x8xf32>
    %cst = arith.constant dense<0.000000e+00> : vector<10x128xf32>
    %2 = tpu.matmul %1, %0, %cst {dimension_numbers = #tpu.dot_dimension_numbers<[1], [0], [0], [1], [0, 0, 1, 1], [], []>} : vector<10x8xf32>, vector<8x128xf32>, vector<10x128xf32> -> vector<10x128xf32>
    %c0_3 = arith.constant 0 : index
    %c0_4 = arith.constant 0 : index
    %3 = vector.load %arg3[%c0_3, %c0_4] : memref<10x1xf32, #tpu.memory_space<vmem>>, vector<10x1xf32>
    %4 = vector.broadcast %3 : vector<10x1xf32> to vector<10x128xf32>
    %5 = arith.addf %2, %4 : vector<10x128xf32>
    %cst_5 = arith.constant 0.000000e+00 : f32
    %6 = vector.broadcast %cst_5 : f32 to vector<10x128xf32>
    %7 = arith.maximumf %5, %6 : vector<10x128xf32>
    %c0_6 = arith.constant 0 : index
    %c0_7 = arith.constant 0 : index
    %8 = vector.load %arg4[%c0_6, %c0_7] : memref<25x10xf32, #tpu.memory_space<vmem>>, vector<25x10xf32>
    %cst_8 = arith.constant dense<0.000000e+00> : vector<25x128xf32>
    %9 = tpu.matmul %8, %7, %cst_8 {dimension_numbers = #tpu.dot_dimension_numbers<[1], [0], [0], [1], [0, 0, 1, 1], [], []>} : vector<25x10xf32>, vector<10x128xf32>, vector<25x128xf32> -> vector<25x128xf32>
    %c0_9 = arith.constant 0 : index
    %c0_10 = arith.constant 0 : index
    %10 = vector.load %arg5[%c0_9, %c0_10] : memref<25x1xf32, #tpu.memory_space<vmem>>, vector<25x1xf32>
    %11 = vector.broadcast %10 : vector<25x1xf32> to vector<25x128xf32>
    %12 = arith.addf %9, %11 : vector<25x128xf32>
    %cst_11 = arith.constant 0.000000e+00 : f32
    %13 = vector.broadcast %cst_11 : f32 to vector<25x128xf32>
    %14 = arith.maximumf %12, %13 : vector<25x128xf32>
    %c0_12 = arith.constant 0 : index
    %c0_13 = arith.constant 0 : index
    %15 = vector.load %arg6[%c0_12, %c0_13] : memref<4x25xf32, #tpu.memory_space<vmem>>, vector<4x25xf32>
    %cst_14 = arith.constant dense<0.000000e+00> : vector<4x128xf32>
    %16 = tpu.matmul %15, %14, %cst_14 {dimension_numbers = #tpu.dot_dimension_numbers<[1], [0], [0], [1], [0, 0, 1, 1], [], []>} : vector<4x25xf32>, vector<25x128xf32>, vector<4x128xf32> -> vector<4x128xf32>
    %c0_15 = arith.constant 0 : index
    %c0_16 = arith.constant 0 : index
    %17 = vector.load %arg7[%c0_15, %c0_16] : memref<4x1xf32, #tpu.memory_space<vmem>>, vector<4x1xf32>
    %18 = vector.broadcast %17 : vector<4x1xf32> to vector<4x128xf32>
    %19 = arith.addf %16, %18 : vector<4x128xf32>
    %cst_17 = arith.constant 0.000000e+00 : f32
    %20 = vector.broadcast %cst_17 : f32 to vector<4x128xf32>
    %21 = arith.maximumf %19, %20 : vector<4x128xf32>
    %c0_18 = arith.constant 0 : index
    %c0_19 = arith.constant 0 : index
    %22 = vector.load %arg8[%c0_18, %c0_19] : memref<25x4xf32, #tpu.memory_space<vmem>>, vector<25x4xf32>
    %cst_20 = arith.constant dense<0.000000e+00> : vector<25x128xf32>
    %23 = tpu.matmul %22, %21, %cst_20 {dimension_numbers = #tpu.dot_dimension_numbers<[1], [0], [0], [1], [0, 0, 1, 1], [], []>} : vector<25x4xf32>, vector<4x128xf32>, vector<25x128xf32> -> vector<25x128xf32>
    %c0_21 = arith.constant 0 : index
    %c0_22 = arith.constant 0 : index
    %24 = vector.load %arg9[%c0_21, %c0_22] : memref<25x1xf32, #tpu.memory_space<vmem>>, vector<25x1xf32>
    %25 = vector.broadcast %24 : vector<25x1xf32> to vector<25x128xf32>
    %26 = arith.addf %23, %25 : vector<25x128xf32>
    %cst_23 = arith.constant 0.000000e+00 : f32
    %27 = vector.broadcast %cst_23 : f32 to vector<25x128xf32>
    %28 = arith.maximumf %26, %27 : vector<25x128xf32>
    %c0_24 = arith.constant 0 : index
    %c0_25 = arith.constant 0 : index
    %29 = vector.load %arg10[%c0_24, %c0_25] : memref<10x25xf32, #tpu.memory_space<vmem>>, vector<10x25xf32>
    %cst_26 = arith.constant dense<0.000000e+00> : vector<10x128xf32>
    %30 = tpu.matmul %29, %28, %cst_26 {dimension_numbers = #tpu.dot_dimension_numbers<[1], [0], [0], [1], [0, 0, 1, 1], [], []>} : vector<10x25xf32>, vector<25x128xf32>, vector<10x128xf32> -> vector<10x128xf32>
    %c0_27 = arith.constant 0 : index
    %c0_28 = arith.constant 0 : index
    %31 = vector.load %arg11[%c0_27, %c0_28] : memref<10x1xf32, #tpu.memory_space<vmem>>, vector<10x1xf32>
    %32 = vector.broadcast %31 : vector<10x1xf32> to vector<10x128xf32>
    %33 = arith.addf %30, %32 : vector<10x128xf32>
    %cst_29 = arith.constant 0.000000e+00 : f32
    %34 = vector.broadcast %cst_29 : f32 to vector<10x128xf32>
    %35 = arith.maximumf %33, %34 : vector<10x128xf32>
    %c0_30 = arith.constant 0 : index
    %c0_31 = arith.constant 0 : index
    %36 = vector.load %arg12[%c0_30, %c0_31] : memref<8x10xf32, #tpu.memory_space<vmem>>, vector<8x10xf32>
    %cst_32 = arith.constant dense<0.000000e+00> : vector<8x128xf32>
    %37 = tpu.matmul %36, %35, %cst_32 {dimension_numbers = #tpu.dot_dimension_numbers<[1], [0], [0], [1], [0, 0, 1, 1], [], []>} : vector<8x10xf32>, vector<10x128xf32>, vector<8x128xf32> -> vector<8x128xf32>
    %c0_33 = arith.constant 0 : index
    %c0_34 = arith.constant 0 : index
    %38 = vector.load %arg13[%c0_33, %c0_34] : memref<8x1xf32, #tpu.memory_space<vmem>>, vector<8x1xf32>
    %39 = vector.broadcast %38 : vector<8x1xf32> to vector<8x128xf32>
    %40 = arith.addf %37, %39 : vector<8x128xf32>
    %cst_35 = arith.constant 0.000000e+00 : f32
    %41 = vector.broadcast %cst_35 : f32 to vector<8x128xf32>
    %42 = arith.maximumf %40, %41 : vector<8x128xf32>
    %c0_36 = arith.constant 0 : index
    %c0_37 = arith.constant 0 : index
    %43 = vector.load %arg14[%c0_36, %c0_37] : memref<8x128xf32, #tpu.memory_space<vmem>>, vector<8x128xf32>
    tpu.vector_store %arg14[%c0_36, %c0_37], %42 {strides = array<i32>} : memref<8x128xf32, #tpu.memory_space<vmem>>, vector<8x128xf32>,
    return
  }
  func.func @transform_0(%arg0: i32) -> (i32, i32) {
    %c0_i32 = arith.constant 0 : i32
    %c0_i32_0 = arith.constant 0 : i32
    return %c0_i32, %arg0 : i32, i32
  }
  func.func @transform_1(%arg0: i32) -> (i32, i32) {
    %c0_i32 = arith.constant 0 : i32
    %c0_i32_0 = arith.constant 0 : i32
    %c0_i32_1 = arith.constant 0 : i32
    return %c0_i32, %c0_i32_0 : i32, i32
  }
  func.func @transform_2(%arg0: i32) -> (i32, i32) {
    %c0_i32 = arith.constant 0 : i32
    %c0_i32_0 = arith.constant 0 : i32
    %c0_i32_1 = arith.constant 0 : i32
    return %c0_i32, %c0_i32_0 : i32, i32
  }
  func.func @transform_3(%arg0: i32) -> (i32, i32) {
    %c0_i32 = arith.constant 0 : i32
    %c0_i32_0 = arith.constant 0 : i32
    %c0_i32_1 = arith.constant 0 : i32
    return %c0_i32, %c0_i32_0 : i32, i32
  }
  func.func @transform_4(%arg0: i32) -> (i32, i32) {
    %c0_i32 = arith.constant 0 : i32
    %c0_i32_0 = arith.constant 0 : i32
    %c0_i32_1 = arith.constant 0 : i32
    return %c0_i32, %c0_i32_0 : i32, i32
  }
  func.func @transform_5(%arg0: i32) -> (i32, i32) {
    %c0_i32 = arith.constant 0 : i32
    %c0_i32_0 = arith.constant 0 : i32
    %c0_i32_1 = arith.constant 0 : i32
    return %c0_i32, %c0_i32_0 : i32, i32
  }
  func.func @transform_6(%arg0: i32) -> (i32, i32) {
    %c0_i32 = arith.constant 0 : i32
    %c0_i32_0 = arith.constant 0 : i32
    %c0_i32_1 = arith.constant 0 : i32
    return %c0_i32, %c0_i32_0 : i32, i32
  }
  func.func @transform_7(%arg0: i32) -> (i32, i32) {
    %c0_i32 = arith.constant 0 : i32
    %c0_i32_0 = arith.constant 0 : i32
    %c0_i32_1 = arith.constant 0 : i32
    return %c0_i32, %c0_i32_0 : i32, i32
  }
  func.func @transform_8(%arg0: i32) -> (i32, i32) {
    %c0_i32 = arith.constant 0 : i32
    %c0_i32_0 = arith.constant 0 : i32
    %c0_i32_1 = arith.constant 0 : i32
    return %c0_i32, %c0_i32_0 : i32, i32
  }
  func.func @transform_9(%arg0: i32) -> (i32, i32) {
    %c0_i32 = arith.constant 0 : i32
    %c0_i32_0 = arith.constant 0 : i32
    %c0_i32_1 = arith.constant 0 : i32
    return %c0_i32, %c0_i32_0 : i32, i32
  }
  func.func @transform_10(%arg0: i32) -> (i32, i32) {
    %c0_i32 = arith.constant 0 : i32
    %c0_i32_0 = arith.constant 0 : i32
    %c0_i32_1 = arith.constant 0 : i32
    return %c0_i32, %c0_i32_0 : i32, i32
  }
  func.func @transform_11(%arg0: i32) -> (i32, i32) {
    %c0_i32 = arith.constant 0 : i32
    %c0_i32_0 = arith.constant 0 : i32
    %c0_i32_1 = arith.constant 0 : i32
    return %c0_i32, %c0_i32_0 : i32, i32
  }
  func.func @transform_12(%arg0: i32) -> (i32, i32) {
    %c0_i32 = arith.constant 0 : i32
    %c0_i32_0 = arith.constant 0 : i32
    %c0_i32_1 = arith.constant 0 : i32
    return %c0_i32, %c0_i32_0 : i32, i32
  }
  func.func @transform_13(%arg0: i32) -> (i32, i32) {
    %c0_i32 = arith.constant 0 : i32
    %c0_i32_0 = arith.constant 0 : i32
    return %c0_i32, %arg0 : i32, i32
  }
}

</mosaic_0001>

<llo_original>
// kernel: tpu_custom_call.1
$region0: #{tpu_custom_call.1}
  #allocation0 [shape = 'u32[]', space=smem, size = 0x4, offset = 0x4, fixed_abs, tag = 'smem constant byte address 0x4 - core index']
  #allocation1 [shape = 'u32[72,128]{1,0:T(1,128)}', space=vmem, size = 0x9000, scoped, tag = 'internal scratch']
  %s0 = inlined_call_operand.vmem [shape: f32[8,128], index: 0, kind: input, shape index: {}]
  %s1 = inlined_call_operand.vmem [shape: f32[10,8], index: 1, kind: input, shape index: {}]
  %s2 = inlined_call_operand.vmem [shape: f32[10,1], index: 2, kind: input, shape index: {}]
  %s3 = inlined_call_operand.vmem [shape: f32[25,10], index: 3, kind: input, shape index: {}]
  %s4 = inlined_call_operand.vmem [shape: f32[25,1], index: 4, kind: input, shape index: {}]
  %s5 = inlined_call_operand.vmem [shape: f32[4,25], index: 5, kind: input, shape index: {}]
  %s6 = inlined_call_operand.vmem [shape: f32[4,1], index: 6, kind: input, shape index: {}]
  %s7 = inlined_call_operand.vmem [shape: f32[25,4], index: 7, kind: input, shape index: {}]
  %s8 = inlined_call_operand.vmem [shape: f32[25,1], index: 8, kind: input, shape index: {}]
  %s9 = inlined_call_operand.vmem [shape: f32[10,25], index: 9, kind: input, shape index: {}]
  %s10 = inlined_call_operand.vmem [shape: f32[10,1], index: 10, kind: input, shape index: {}]
  %s11 = inlined_call_operand.vmem [shape: f32[8,10], index: 11, kind: input, shape index: {}]
  %s12 = inlined_call_operand.vmem [shape: f32[8,1], index: 12, kind: input, shape index: {}]
  %s13 = inlined_call_operand.hbm [shape: f32[8,128], index: 13, kind: output, shape index: {}]
  %s14 = sld [smem:[#allocation0]]
  $region62: #{tpu_custom_call.1} parent=0
    _
  %s16 = ssub.s32 1, %s14
  %s17 = scalar_select 0, %s16, %s14
  $region1: #{tpu_custom_call.1} parent=0
    #allocation2 [shape = 'u8[4096]{0}', space=vmem, size = 0x1000, scoped, tag = 'output window, operand 0, single buffered']
    #allocation3 [shape = 's32[1]{0}', space=sflag, size = 0x4, scoped, tag = 'scoped memory for tpu_custom_call.1']
    %18 = vsyncpa [#allocation3], 0
    // Predicated region
    $region2: #{tpu_custom_call.1} parent=1 // pred_check
      _
    $region3: #{tpu_custom_call.1} parent=1 // pred_check_branch
      %20 = sbr.rel (0) target = $region5
    $region4: #{tpu_custom_call.1} parent=1 // pred_region
      _
    $region5: #{tpu_custom_call.1} parent=1 // pred_fallthru
      _
    // Predicated region
    $region6: #{tpu_custom_call.1} parent=1 // pred_check
      _
    $region7: #{tpu_custom_call.1} parent=1 // pred_check_branch
      %22 = sbr.rel (0) target = $region9
    $region8: #{tpu_custom_call.1} parent=1 // pred_region
      _
    $region9: #{tpu_custom_call.1} parent=1 // pred_fallthru
      _
    // Predicated region
    $region10: #{tpu_custom_call.1} parent=1 // pred_check
      _
    $region11: #{tpu_custom_call.1} parent=1 // pred_check_branch
      %24 = sbr.rel (0) target = $region13
    $region12: #{tpu_custom_call.1} parent=1 // pred_region
      _
    $region13: #{tpu_custom_call.1} parent=1 // pred_fallthru
      _
    // Predicated region
    $region14: #{tpu_custom_call.1} parent=1 // pred_check
      _
    $region15: #{tpu_custom_call.1} parent=1 // pred_check_branch
      %26 = sbr.rel (0) target = $region17
    $region16: #{tpu_custom_call.1} parent=1 // pred_region
      _
    $region17: #{tpu_custom_call.1} parent=1 // pred_fallthru
      _
    // Predicated region
    $region18: #{tpu_custom_call.1} parent=1 // pred_check
      _
    $region19: #{tpu_custom_call.1} parent=1 // pred_check_branch
      %28 = sbr.rel (0) target = $region21
    $region20: #{tpu_custom_call.1} parent=1 // pred_region
      _
    $region21: #{tpu_custom_call.1} parent=1 // pred_fallthru
      _
    // Predicated region
    $region22: #{tpu_custom_call.1} parent=1 // pred_check
      _
    $region23: #{tpu_custom_call.1} parent=1 // pred_check_branch
      %30 = sbr.rel (0) target = $region25
    $region24: #{tpu_custom_call.1} parent=1 // pred_region
      _
    $region25: #{tpu_custom_call.1} parent=1 // pred_fallthru
      _
    // Predicated region
    $region26: #{tpu_custom_call.1} parent=1 // pred_check
      _
    $region27: #{tpu_custom_call.1} parent=1 // pred_check_branch
      %32 = sbr.rel (0) target = $region29
    $region28: #{tpu_custom_call.1} parent=1 // pred_region
      _
    $region29: #{tpu_custom_call.1} parent=1 // pred_fallthru
      _
    // Predicated region
    $region30: #{tpu_custom_call.1} parent=1 // pred_check
      _
    $region31: #{tpu_custom_call.1} parent=1 // pred_check_branch
      %34 = sbr.rel (0) target = $region33
    $region32: #{tpu_custom_call.1} parent=1 // pred_region
      _
    $region33: #{tpu_custom_call.1} parent=1 // pred_fallthru
      _
    // Predicated region
    $region34: #{tpu_custom_call.1} parent=1 // pred_check
      _
    $region35: #{tpu_custom_call.1} parent=1 // pred_check_branch
      %36 = sbr.rel (0) target = $region37
    $region36: #{tpu_custom_call.1} parent=1 // pred_region
      _
    $region37: #{tpu_custom_call.1} parent=1 // pred_fallthru
      _
    // Predicated region
    $region38: #{tpu_custom_call.1} parent=1 // pred_check
      _
    $region39: #{tpu_custom_call.1} parent=1 // pred_check_branch
      %38 = sbr.rel (0) target = $region41
    $region40: #{tpu_custom_call.1} parent=1 // pred_region
      _
    $region41: #{tpu_custom_call.1} parent=1 // pred_fallthru
      _
    // Predicated region
    $region42: #{tpu_custom_call.1} parent=1 // pred_check
      _
    $region43: #{tpu_custom_call.1} parent=1 // pred_check_branch
      %40 = sbr.rel (0) target = $region45
    $region44: #{tpu_custom_call.1} parent=1 // pred_region
      _
    $region45: #{tpu_custom_call.1} parent=1 // pred_fallthru
      _
    // Predicated region
    $region46: #{tpu_custom_call.1} parent=1 // pred_check
      _
    $region47: #{tpu_custom_call.1} parent=1 // pred_check_branch
      %42 = sbr.rel (0) target = $region49
    $region48: #{tpu_custom_call.1} parent=1 // pred_region
      _
    $region49: #{tpu_custom_call.1} parent=1 // pred_fallthru
      _
    // Predicated region
    $region50: #{tpu_custom_call.1} parent=1 // pred_check
      _
    $region51: #{tpu_custom_call.1} parent=1 // pred_check_branch
      %44 = sbr.rel (0) target = $region53
    $region52: #{tpu_custom_call.1} parent=1 // pred_region
      _
    $region53: #{tpu_custom_call.1} parent=1 // pred_fallthru
      _
    %v45 = vld [vmem:[%s0] sm:$0xff]
    %v46 = vld [vmem:[%s1] sm:$0xff]
    %v47 = vld [vmem:[%s1 + $0x8] sm:$0x3]
    %v48 = vld [vmem:[%s2] sm:$0xff]
    %v49 = vld [vmem:[%s2 + $0x8] sm:$0x3]
    %51 = vset.pattern.permute.xlu0 0
    %52 = vperm.xlu0 %51, %v48
    %v53 = vpop.permute.xlu0 %52
    %56 = vset.pattern.permute.xlu0 0
    %57 = vperm.xlu0 %56, %v49
    %v58 = vpop.permute.xlu0 %57
    %vm60 = vcmask 64512
    %v62 = vsel %vm60, %v46, 0
    %v65 = vsel %vm60, %v47, 0
    %67 = vmatpush.msra.mxu0 0.0
    %68 = vmatpush.msra.mxu0 0.0
    %69 = vmatpush.msra.mxu0 0.0
    %70 = vmatpush.msra.mxu0 0.0
    %71 = vmatpush.msra.mxu0 0.0
    %72 = vmatpush.msra.mxu0 0.0
    %73 = vmatpush.msra.mxu0 0.0
    %74 = vmatpush.msra.mxu0 0.0
    %75 = vmatpush.msra.mxu0 0.0
    %76 = vmatpush.msra.mxu0 0.0
    %77 = vmatpush.msra.mxu0 0.0
    %78 = vmatpush.msra.mxu0 0.0
    %79 = vmatpush.msra.mxu0 0.0
    %80 = vmatpush.msra.mxu0 0.0
    %81 = vmatpush.msra.mxu0 0.0
    %82 = vmatpush.msra.mxu0 %v45
    %83 = vmatmul.f32.gmra.mxu0 %v62
    %v84 = vpop.f32.mrf.mxu0
    %v85 = vadd.f32 %v53, %v84
    %86 = vmatmul.f32.gmra.mxu0 %v65
    %v87 = vpop.f32.mrf.mxu0
    %v88 = vadd.f32 %v58, %v87
    %89 = vdwg.mxu0
    %v90 = vmax.f32 %v85, 0.0
    %v91 = vmax.f32 %v88, 0.0
    %v92 = vld [vmem:[%s3] sm:$0xff]
    %v93 = vld [vmem:[%s3 + $0x8] sm:$0xff]
    %v94 = vld [vmem:[%s3 + $0x10] sm:$0xff]
    %v95 = vld [vmem:[%s3 + $0x18] sm:$0x1]
    %v96 = vld [vmem:[%s4] sm:$0xff]
    %v97 = vld [vmem:[%s4 + $0x8] sm:$0xff]
    %v98 = vld [vmem:[%s4 + $0x10] sm:$0xff]
    %v99 = vld [vmem:[%s4 + $0x18] sm:$0x1]
    %101 = vset.pattern.permute.xlu0 0
    %102 = vperm.xlu0 %101, %v96
    %v103 = vpop.permute.xlu0 %102
    %106 = vset.pattern.permute.xlu0 0
    %107 = vperm.xlu0 %106, %v97
    %v108 = vpop.permute.xlu0 %107
    %111 = vset.pattern.permute.xlu0 0
    %112 = vperm.xlu0 %111, %v98
    %v113 = vpop.permute.xlu0 %112
    %116 = vset.pattern.permute.xlu0 0
    %117 = vperm.xlu0 %116, %v99
    %v118 = vpop.permute.xlu0 %117
    %vm120 = vcmask 80896
    %v122 = vsel %vm120, %v92, 0
    %v125 = vsel %vm120, %v93, 0
    %v128 = vsel %vm120, %v94, 0
    %v131 = vsel %vm120, %v95, 0
    %vm133 = vcmask 1041408
    %v135 = vsel %vm133, %v91, 0
    %137 = vmatpush.msra.mxu0 0.0
    %138 = vmatpush.msra.mxu0 0.0
    %139 = vmatpush.msra.mxu0 0.0
    %140 = vmatpush.msra.mxu0 0.0
    %141 = vmatpush.msra.mxu0 0.0
    %142 = vmatpush.msra.mxu0 0.0
    %143 = vmatpush.msra.mxu0 0.0
    %144 = vmatpush.msra.mxu0 0.0
    %145 = vmatpush.msra.mxu0 0.0
    %146 = vmatpush.msra.mxu0 0.0
    %147 = vmatpush.msra.mxu0 0.0
    %148 = vmatpush.msra.mxu0 0.0
    %149 = vmatpush.msra.mxu0 0.0
    %150 = vmatpush.msra.mxu0 0.0
    %151 = vmatpush.msra.mxu0 %v135
    %152 = vmatpush.msra.mxu0 %v90
    %153 = vmatmul.f32.gmra.mxu0 %v122
    %v154 = vpop.f32.mrf.mxu0
    %v155 = vadd.f32 %v103, %v154
    %156 = vmatmul.f32.gmra.mxu0 %v125
    %v157 = vpop.f32.mrf.mxu0
    %v158 = vadd.f32 %v108, %v157
    %159 = vmatmul.f32.gmra.mxu0 %v128
    %v160 = vpop.f32.mrf.mxu0
    %v161 = vadd.f32 %v113, %v160
    %162 = vmatmul.f32.gmra.mxu0 %v131
    %v163 = vpop.f32.mrf.mxu0
    %v164 = vadd.f32 %v118, %v163
    %165 = vdwg.mxu0
    %v166 = vmax.f32 %v155, 0.0
    %v167 = vmax.f32 %v158, 0.0
    %v168 = vmax.f32 %v161, 0.0
    %v169 = vmax.f32 %v164, 0.0
    %v170 = vld [vmem:[%s5] sm:$0xf]
    %v171 = vld [vmem:[%s6] sm:$0xf]
    %173 = vset.pattern.permute.xlu0 0
    %174 = vperm.xlu0 %173, %v171
    %v175 = vpop.permute.xlu0 %174
    %vm177 = vcmask 203776
    %v179 = vsel %vm177, %v170, 0
    %vm181 = vcmask 1040384
    %v183 = vsel %vm181, %v169, 0
    %185 = vmatpush.msra.mxu0 0.0
    %186 = vmatpush.msra.mxu0 0.0
    %187 = vmatpush.msra.mxu0 0.0
    %188 = vmatpush.msra.mxu0 0.0
    %189 = vmatpush.msra.mxu0 0.0
    %190 = vmatpush.msra.mxu0 0.0
    %191 = vmatpush.msra.mxu0 0.0
    %192 = vmatpush.msra.mxu0 0.0
    %193 = vmatpush.msra.mxu0 0.0
    %194 = vmatpush.msra.mxu0 0.0
    %195 = vmatpush.msra.mxu0 0.0
    %196 = vmatpush.msra.mxu0 0.0
    %197 = vmatpush.msra.mxu0 %v183
    %198 = vmatpush.msra.mxu0 %v168
    %199 = vmatpush.msra.mxu0 %v167
    %200 = vmatpush.msra.mxu0 %v166
    %201 = vmatmul.f32.gmra.mxu0 %v179
    %v202 = vpop.f32.mrf.mxu0
    %v203 = vadd.f32 %v175, %v202
    %204 = vdwg.mxu0
    %v205 = vmax.f32 %v203, 0.0
    %v206 = vld [vmem:[%s7] sm:$0xff]
    %v207 = vld [vmem:[%s7 + $0x8] sm:$0xff]
    %v208 = vld [vmem:[%s7 + $0x10] sm:$0xff]
    %v209 = vld [vmem:[%s7 + $0x18] sm:$0x1]
    %v210 = vld [vmem:[%s8] sm:$0xff]
    %v211 = vld [vmem:[%s8 + $0x8] sm:$0xff]
    %v212 = vld [vmem:[%s8 + $0x10] sm:$0xff]
    %v213 = vld [vmem:[%s8 + $0x18] sm:$0x1]
    %215 = vset.pattern.permute.xlu0 0
    %216 = vperm.xlu0 %215, %v210
    %v217 = vpop.permute.xlu0 %216
    %220 = vset.pattern.permute.xlu0 0
    %221 = vperm.xlu0 %220, %v211
    %v222 = vpop.permute.xlu0 %221
    %225 = vset.pattern.permute.xlu0 0
    %226 = vperm.xlu0 %225, %v212
    %v227 = vpop.permute.xlu0 %226
    %230 = vset.pattern.permute.xlu0 0
    %231 = vperm.xlu0 %230, %v213
    %v232 = vpop.permute.xlu0 %231
    %vm234 = vcmask 31744
    %v236 = vsel %vm234, %v206, 0
    %v239 = vsel %vm234, %v207, 0
    %v242 = vsel %vm234, %v208, 0
    %v245 = vsel %vm234, %v209, 0
    %vm247 = vcmask 1043456
    %v249 = vsel %vm247, %v205, 0
    %251 = vmatpush.msra.mxu0 0.0
    %252 = vmatpush.msra.mxu0 0.0
    %253 = vmatpush.msra.mxu0 0.0
    %254 = vmatpush.msra.mxu0 0.0
    %255 = vmatpush.msra.mxu0 0.0
    %256 = vmatpush.msra.mxu0 0.0
    %257 = vmatpush.msra.mxu0 0.0
    %258 = vmatpush.msra.mxu0 0.0
    %259 = vmatpush.msra.mxu0 0.0
    %260 = vmatpush.msra.mxu0 0.0
    %261 = vmatpush.msra.mxu0 0.0
    %262 = vmatpush.msra.mxu0 0.0
    %263 = vmatpush.msra.mxu0 0.0
    %264 = vmatpush.msra.mxu0 0.0
    %265 = vmatpush.msra.mxu0 0.0
    %266 = vmatpush.msra.mxu0 %v249
    %267 = vmatmul.f32.gmra.mxu0 %v236
    %v268 = vpop.f32.mrf.mxu0
    %v269 = vadd.f32 %v217, %v268
    %270 = vmatmul.f32.gmra.mxu0 %v239
    %v271 = vpop.f32.mrf.mxu0
    %v272 = vadd.f32 %v222, %v271
    %273 = vmatmul.f32.gmra.mxu0 %v242
    %v274 = vpop.f32.mrf.mxu0
    %v275 = vadd.f32 %v227, %v274
    %276 = vmatmul.f32.gmra.mxu0 %v245
    %v277 = vpop.f32.mrf.mxu0
    %v278 = vadd.f32 %v232, %v277
    %279 = vdwg.mxu0
    %v280 = vmax.f32 %v269, 0.0
    %v281 = vmax.f32 %v272, 0.0
    %v282 = vmax.f32 %v275, 0.0
    %v283 = vmax.f32 %v278, 0.0
    %v284 = vld [vmem:[%s9] sm:$0xff]
    %v285 = vld [vmem:[%s9 + $0x8] sm:$0x3]
    %v286 = vld [vmem:[%s10] sm:$0xff]
    %v287 = vld [vmem:[%s10 + $0x8] sm:$0x3]
    %289 = vset.pattern.permute.xlu0 0
    %290 = vperm.xlu0 %289, %v286
    %v291 = vpop.permute.xlu0 %290
    %294 = vset.pattern.permute.xlu0 0
    %295 = vperm.xlu0 %294, %v287
    %v296 = vpop.permute.xlu0 %295
    %v299 = vsel %vm177, %v284, 0
    %v302 = vsel %vm177, %v285, 0
    %v305 = vsel %vm181, %v283, 0
    %307 = vmatpush.msra.mxu0 0.0
    %308 = vmatpush.msra.mxu0 0.0
    %309 = vmatpush.msra.mxu0 0.0
    %310 = vmatpush.msra.mxu0 0.0
    %311 = vmatpush.msra.mxu0 0.0
    %312 = vmatpush.msra.mxu0 0.0
    %313 = vmatpush.msra.mxu0 0.0
    %314 = vmatpush.msra.mxu0 0.0
    %315 = vmatpush.msra.mxu0 0.0
    %316 = vmatpush.msra.mxu0 0.0
    %317 = vmatpush.msra.mxu0 0.0
    %318 = vmatpush.msra.mxu0 0.0
    %319 = vmatpush.msra.mxu0 %v305
    %320 = vmatpush.msra.mxu0 %v282
    %321 = vmatpush.msra.mxu0 %v281
    %322 = vmatpush.msra.mxu0 %v280
    %323 = vmatmul.f32.gmra.mxu0 %v299
    %v324 = vpop.f32.mrf.mxu0
    %v325 = vadd.f32 %v291, %v324
    %326 = vmatmul.f32.gmra.mxu0 %v302
    %v327 = vpop.f32.mrf.mxu0
    %v328 = vadd.f32 %v296, %v327
    %329 = vdwg.mxu0
    %v330 = vmax.f32 %v325, 0.0
    %v331 = vmax.f32 %v328, 0.0
    %v332 = vld [vmem:[%s11] sm:$0xff]
    %v333 = vld [vmem:[%s12] sm:$0xff]
    %335 = vset.pattern.permute.xlu0 0
    %336 = vperm.xlu0 %335, %v333
    %v337 = vpop.permute.xlu0 %336
    %v340 = vsel %vm120, %v332, 0
    %v343 = vsel %vm133, %v331, 0
    %345 = vmatpush.msra.mxu0 0.0
    %346 = vmatpush.msra.mxu0 0.0
    %347 = vmatpush.msra.mxu0 0.0
    %348 = vmatpush.msra.mxu0 0.0
    %349 = vmatpush.msra.mxu0 0.0
    %350 = vmatpush.msra.mxu0 0.0
    %351 = vmatpush.msra.mxu0 0.0
    %352 = vmatpush.msra.mxu0 0.0
    %353 = vmatpush.msra.mxu0 0.0
    %354 = vmatpush.msra.mxu0 0.0
    %355 = vmatpush.msra.mxu0 0.0
    %356 = vmatpush.msra.mxu0 0.0
    %357 = vmatpush.msra.mxu0 0.0
    %358 = vmatpush.msra.mxu0 0.0
    %359 = vmatpush.msra.mxu0 %v343
    %360 = vmatpush.msra.mxu0 %v330
    %361 = vmatmul.f32.gmra.mxu0 %v340
    %v362 = vpop.f32.mrf.mxu0
    %v363 = vadd.f32 %v337, %v362
    %364 = vdwg.mxu0
    %v365 = vmax.f32 %v363, 0.0
    %366 = vst [vmem:[#allocation2] sm:$0xff] %v365
    // Predicated region
    $region54: #{tpu_custom_call.1} parent=1 // pred_check
      _
    $region55: #{tpu_custom_call.1} parent=1 // pred_check_branch
      %368 = sbr.rel (0) target = $region57
    $region56: #{tpu_custom_call.1} parent=1 // pred_region
      %370 = vsyncadd [#allocation3], 0
      %s372 = sshll.u32 [#allocation2], 4
      %s373 = int_to_ptr.vmem [resolvable:$true] %s372
      %s374 = sshll.u32 %s13, 4
      %s375 = int_to_ptr.hbm [resolvable:$true] %s374
      %377 = dma.vmem_to_hbm [thread:$0]  %s373, 128, %s375, [#allocation3]
    $region57: #{tpu_custom_call.1} parent=1 // pred_fallthru
      _
    // Predicated region
    $region58: #{tpu_custom_call.1} parent=1 // pred_check
      _
    $region59: #{tpu_custom_call.1} parent=1 // pred_check_branch
      %379 = sbr.rel (0) target = $region61
    $region60: #{tpu_custom_call.1} parent=1 // pred_region
      %381 = dma.done [#allocation3], 128
    $region61: #{tpu_custom_call.1} parent=1 // pred_fallthru
      _
    %382 = vsyncpa [#allocation3], 1

</llo_original>
